<compile_context>
chip_gen: v7x
topology: tpu7x:2x2x1
jax: 0.10.0
libtpu: 0.0.40
codegen_flags: <defaults>
</compile_context>

<pallas_src>
import numpy as np
import jax
import jax.numpy as jnp
from jax.experimental import pallas as pl
from jax.experimental.pallas import tpu as pltpu


# ----------------------- deterministic "parameters" (numpy) -----------------------

def hann_window_periodic(n_fft: int) -> np.ndarray:
    n = np.arange(n_fft, dtype=np.float64)
    return (0.5 * (1.0 - np.cos(2.0 * np.pi * n / n_fft))).astype(np.float32)


def rdft_matrices(n_fft: int):
    """Real-DFT basis: re = x @ C, im = x @ S  (shapes (n_fft, n_fft//2+1))."""
    n_freq = n_fft // 2 + 1
    n = np.arange(n_fft, dtype=np.float64)[:, None]
    k = np.arange(n_freq, dtype=np.float64)[None, :]
    ang = 2.0 * np.pi * n * k / n_fft
    return np.cos(ang).astype(np.float32), (-np.sin(ang)).astype(np.float32)


def melscale_fbanks_htk(n_freqs, f_min, f_max, n_mels, sample_rate) -> np.ndarray:
    """torchaudio.functional.melscale_fbanks (mel_scale='htk', norm=None)."""
    all_freqs = np.linspace(0.0, sample_rate // 2, n_freqs)

    def hz_to_mel(f):
        return 2595.0 * np.log10(1.0 + f / 700.0)

    def mel_to_hz(m):
        return 700.0 * (10.0 ** (m / 2595.0) - 1.0)

    m_pts = np.linspace(hz_to_mel(f_min), hz_to_mel(f_max), n_mels + 2)
    f_pts = mel_to_hz(m_pts)
    f_diff = f_pts[1:] - f_pts[:-1]                       # (n_mels + 1,)
    slopes = f_pts[None, :] - all_freqs[:, None]          # (n_freqs, n_mels + 2)
    down = (-slopes[:, :-2]) / f_diff[:-1]
    up = slopes[:, 2:] / f_diff[1:]
    return np.maximum(0.0, np.minimum(down, up)).astype(np.float32)   # (n_freqs, n_mels)


# ---------------------------------- Pallas wrapper --------------------------------

def feature_extractor(x, *, sample_rate, n_fft, hop_length, n_mels,
                      f_min=0.0, f_max=None, batch_block=1):
    """x: (B, L) float32 audio -> (B, n_mels, T) normalized log-mel spectrogram."""
    if f_max is None:
        f_max = sample_rate / 2.0
    B, L = x.shape
    assert n_fft % hop_length == 0, "in-kernel framing requires hop | n_fft"
    assert B % batch_block == 0
    bt = batch_block
    hop = hop_length
    r = n_fft // hop                       # frame overlap factor (K-split count)
    n_freq = n_fft // 2 + 1
    F = ((n_freq + 127) // 128) * 128      # lane-padded frequency bins
    pad = n_fft // 2

    # --- glue (pure JAX, cheap): reflect pad + non-overlapping hop chunking ------
    xp = jnp.pad(x.astype(jnp.float32), ((0, 0), (pad, pad)), mode="reflect")
    Lp = L + 2 * pad
    T = 1 + (Lp - n_fft) // hop
    n_chunks = T + r - 1                   # hop-chunks actually consumed
    chunks = xp[:, : n_chunks * hop].reshape(B, n_chunks, hop)    # (B, n_chunks, hop)

    # --- deterministic weights: Hann folded in, cos|sin fused, zero lane-padded --
    win = hann_window_periodic(n_fft)
    cos_m, sin_m = rdft_matrices(n_fft)
    w_np = np.zeros((n_fft, 2 * F), np.float32)
    w_np[:, :n_freq] = win[:, None] * cos_m
    w_np[:, F:F + n_freq] = win[:, None] * sin_m
    fb_np = np.zeros((F, n_mels), np.float32)
    fb_np[:n_freq] = melscale_fbanks_htk(n_freq, f_min, f_max, n_mels, sample_rate)
    w = jnp.asarray(w_np, dtype=jnp.bfloat16)        # (n_fft, 2F), MXU-native
    fb = jnp.asarray(fb_np, dtype=jnp.bfloat16)      # (F, n_mels)

    def kernel(x_ref, w_ref, fb_ref, o_ref):
        # x_ref : (bt, n_chunks, hop) f32  hop-chunks of reflect-padded audio
        # w_ref : (n_fft, 2F)        bf16  windowed [cos | sin] rDFT basis (0-padded)
        # fb_ref: (F, n_mels)        bf16  mel filterbank (0-padded contraction rows)
        # o_ref : (bt, n_mels, T)    f32   normalized log-mel output
        def rows(j):   # hop-shifted chunk view = frame columns [j*hop, (j+1)*hop)
            return (x_ref[:, pl.ds(j, T), :]
                    .reshape(bt * T, hop).astype(jnp.bfloat16))

        # Split-K DFT: overlapping frames are never materialized; each shift does
        # one fused cos|sin bf16 matmul with f32 accumulation.
        acc = jnp.dot(rows(0), w_ref[pl.ds(0, hop), :],
                      preferred_element_type=jnp.float32)
        for j in range(1, r):
            acc = acc + jnp.dot(rows(j), w_ref[pl.ds(j * hop, hop), :],
                                preferred_element_type=jnp.float32)

        re = acc[:, :F]
        im = acc[:, F:]
        power = re * re + im * im                                   # (bt*T, F) f32
        mel = jnp.dot(power.astype(jnp.bfloat16), fb_ref[...],
                      preferred_element_type=jnp.float32)           # (bt*T, n_mels)

        # AmplitudeToDB: amin=1e-10, ref=1.0, top_db=None
        db = 10.0 * jnp.log10(jnp.maximum(mel, 1e-10))
        db = db.reshape(bt, T, n_mels)

        # MinMaxNorm exactly as in the reference (names intentionally swapped there)
        min_ = jnp.max(jnp.max(db, axis=2, keepdims=True), axis=1, keepdims=True)
        max_ = jnp.min(jnp.min(db, axis=2, keepdims=True), axis=1, keepdims=True)
        norm = (db - min_) / (max_ - min_ + 1e-6)

        # Store as (bt, n_mels, T): T (large in practice) on the lane axis -> dense vst
        o_ref[...] = jnp.swapaxes(norm, 1, 2)

    # NOTE(v7x): for realistic sizes (n_fft >= 1024, T in the thousands) add an
    # "arbitrary" T-tile grid axis with running min/max scratch and single-buffer
    # the constant w/fb operands to respect 64 MiB VMEM; unnecessary at these shapes.
    out = pl.pallas_call(
        kernel,
        out_shape=jax.ShapeDtypeStruct((B, n_mels, T), jnp.float32),
        grid_spec=pltpu.PrefetchScalarGridSpec(
            num_scalar_prefetch=0,
            grid=(B // bt,),
            in_specs=[
                pl.BlockSpec((bt, n_chunks, hop), lambda b: (b, 0, 0)),
                pl.BlockSpec((n_fft, 2 * F), lambda b: (0, 0)),
                pl.BlockSpec((F, n_mels), lambda b: (0, 0)),
            ],
            out_specs=pl.BlockSpec((bt, n_mels, T), lambda b: (b, 0, 0)),
        ),
        compiler_params=pltpu.CompilerParams(dimension_semantics=("parallel",)),
    )(chunks, w, fb)
    return out                                                      # (B, n_mels, T)


# -------------------------------- pure-JAX reference -------------------------------

def feature_extractor_ref(x, *, sample_rate, n_fft, hop_length, n_mels,
                          f_min=0.0, f_max=None):
    if f_max is None:
        f_max = sample_rate / 2.0
    pad = n_fft // 2
    n_freq = n_fft // 2 + 1
    xp = jnp.pad(x.astype(jnp.float32), ((0, 0), (pad, pad)), mode="reflect")
    T = 1 + (xp.shape[1] - n_fft) // hop_length
    idx = np.arange(T)[:, None] * hop_length + np.arange(n_fft)[None, :]
    frames = xp[:, idx]                                             # (B, T, n_fft)
    win = jnp.asarray(hann_window_periodic(n_fft))
    cos_m, sin_m = rdft_matrices(n_fft)
    fb = jnp.asarray(melscale_fbanks_htk(n_freq, f_min, f_max, n_mels, sample_rate))
    xw = frames * win[None, None, :]
    re = jnp.einsum("btn,nk->btk", xw, jnp.asarray(cos_m))
    im = jnp.einsum("btn,nk->btk", xw, jnp.asarray(sin_m))
    power = re * re + im * im
    mel = jnp.einsum("btk,km->btm", power, fb)
    db = 10.0 * jnp.log10(jnp.maximum(mel, 1e-10))
    db = jnp.transpose(db, (0, 2, 1))                               # (B, n_mels, T)
    min_ = jnp.max(db, axis=(1, 2), keepdims=True)
    max_ = jnp.min(db, axis=(1, 2), keepdims=True)
    return (db - min_) / (max_ - min_ + 1e-6)


# TODO(synk): training-path augmentations (Mixup, CustomFreq/TimeMasking driven by
# np.random) are identity in eval mode and are not translated.

if __name__ == "__main__":
    # Small but consistent shapes: batch=2, audio length=480 samples.
    SR, N_FFT, HOP, N_MELS = 16000, 128, 32, 32
    key = jax.random.PRNGKey(0)
    x = jax.random.normal(key, (2, 480), dtype=jnp.float32)

    out = feature_extractor(x, sample_rate=SR, n_fft=N_FFT, hop_length=HOP,
                            n_mels=N_MELS)
    out = jax.block_until_ready(out)

    ref = feature_extractor_ref(x, sample_rate=SR, n_fft=N_FFT, hop_length=HOP,
                                n_mels=N_MELS)
    T = 1 + 480 // HOP
    assert out.shape == ref.shape == (2, N_MELS, T)
    np.testing.assert_allclose(np.asarray(out), np.asarray(ref), rtol=1e-2, atol=1e-2)

    print("KERNEL_OK")
</pallas_src>

<mosaic_0001>
module attributes {stable_mosaic.version = 11 : i64} {
  func.func @kernel(%arg0: i32, %arg1: memref<1x19x32xf32, #tpu.memory_space<vmem>>, %arg2: memref<128x256xbf16, #tpu.memory_space<vmem>>, %arg3: memref<128x32xbf16, #tpu.memory_space<vmem>>, %arg4: memref<1x32x16xf32, #tpu.memory_space<vmem>>) attributes {dimension_semantics = [#tpu.dimension_semantics<parallel>], iteration_bounds = array<i64: 2>, scalar_prefetch = 0 : i64, scratch_operands = 0 : i64, tpu.core_type = #tpu.core_type<tc>, window_params = [{transform_indices = @transform_0, window_bounds = array<i64: 1, 19, 32>}, {pipeline_mode = #tpu.pipeline_mode<synchronous>, transform_indices = @transform_1, window_bounds = array<i64: 128, 256>}, {pipeline_mode = #tpu.pipeline_mode<synchronous>, transform_indices = @transform_2, window_bounds = array<i64: 128, 32>}, {transform_indices = @transform_3, window_bounds = array<i64: 1, 32, 16>}]} {
    %c0 = arith.constant 0 : index
    %c0_0 = arith.constant 0 : index
    %c0_1 = arith.constant 0 : index
    %0 = vector.load %arg1[%c0, %c0_0, %c0_1] : memref<1x19x32xf32, #tpu.memory_space<vmem>>, vector<1x16x32xf32>
    %1 = vector.shape_cast %0 : vector<1x16x32xf32> to vector<16x32xf32>
    %2 = arith.truncf %1 : vector<16x32xf32> to vector<16x32xbf16>
    %c0_2 = arith.constant 0 : index
    %c0_3 = arith.constant 0 : index
    %3 = vector.load %arg2[%c0_2, %c0_3] : memref<128x256xbf16, #tpu.memory_space<vmem>>, vector<32x256xbf16>
    %cst = arith.constant dense<0.000000e+00> : vector<16x256xf32>
    %4 = tpu.matmul %2, %3, %cst {dimension_numbers = #tpu.dot_dimension_numbers<[1], [0], [0], [1], [0, 0, 1, 1], [], []>} : vector<16x32xbf16>, vector<32x256xbf16>, vector<16x256xf32> -> vector<16x256xf32>
    %c0_4 = arith.constant 0 : index
    %c1 = arith.constant 1 : index
    %c0_5 = arith.constant 0 : index
    %5 = vector.load %arg1[%c0_4, %c1, %c0_5] : memref<1x19x32xf32, #tpu.memory_space<vmem>>, vector<1x16x32xf32>
    %6 = vector.shape_cast %5 : vector<1x16x32xf32> to vector<16x32xf32>
    %7 = arith.truncf %6 : vector<16x32xf32> to vector<16x32xbf16>
    %c32 = arith.constant 32 : index
    %c0_6 = arith.constant 0 : index
    %8 = vector.load %arg2[%c32, %c0_6] : memref<128x256xbf16, #tpu.memory_space<vmem>>, vector<32x256xbf16>
    %cst_7 = arith.constant dense<0.000000e+00> : vector<16x256xf32>
    %9 = tpu.matmul %7, %8, %cst_7 {dimension_numbers = #tpu.dot_dimension_numbers<[1], [0], [0], [1], [0, 0, 1, 1], [], []>} : vector<16x32xbf16>, vector<32x256xbf16>, vector<16x256xf32> -> vector<16x256xf32>
    %10 = arith.addf %4, %9 : vector<16x256xf32>
    %c0_8 = arith.constant 0 : index
    %c2 = arith.constant 2 : index
    %c0_9 = arith.constant 0 : index
    %11 = vector.load %arg1[%c0_8, %c2, %c0_9] : memref<1x19x32xf32, #tpu.memory_space<vmem>>, vector<1x16x32xf32>
    %12 = vector.shape_cast %11 : vector<1x16x32xf32> to vector<16x32xf32>
    %13 = arith.truncf %12 : vector<16x32xf32> to vector<16x32xbf16>
    %c64 = arith.constant 64 : index
    %c0_10 = arith.constant 0 : index
    %14 = vector.load %arg2[%c64, %c0_10] : memref<128x256xbf16, #tpu.memory_space<vmem>>, vector<32x256xbf16>
    %cst_11 = arith.constant dense<0.000000e+00> : vector<16x256xf32>
    %15 = tpu.matmul %13, %14, %cst_11 {dimension_numbers = #tpu.dot_dimension_numbers<[1], [0], [0], [1], [0, 0, 1, 1], [], []>} : vector<16x32xbf16>, vector<32x256xbf16>, vector<16x256xf32> -> vector<16x256xf32>
    %16 = arith.addf %10, %15 : vector<16x256xf32>
    %c0_12 = arith.constant 0 : index
    %c3 = arith.constant 3 : index
    %c0_13 = arith.constant 0 : index
    %17 = vector.load %arg1[%c0_12, %c3, %c0_13] : memref<1x19x32xf32, #tpu.memory_space<vmem>>, vector<1x16x32xf32>
    %18 = vector.shape_cast %17 : vector<1x16x32xf32> to vector<16x32xf32>
    %19 = arith.truncf %18 : vector<16x32xf32> to vector<16x32xbf16>
    %c96 = arith.constant 96 : index
    %c0_14 = arith.constant 0 : index
    %20 = vector.load %arg2[%c96, %c0_14] : memref<128x256xbf16, #tpu.memory_space<vmem>>, vector<32x256xbf16>
    %cst_15 = arith.constant dense<0.000000e+00> : vector<16x256xf32>
    %21 = tpu.matmul %19, %20, %cst_15 {dimension_numbers = #tpu.dot_dimension_numbers<[1], [0], [0], [1], [0, 0, 1, 1], [], []>} : vector<16x32xbf16>, vector<32x256xbf16>, vector<16x256xf32> -> vector<16x256xf32>
    %22 = arith.addf %16, %21 : vector<16x256xf32>
    %23 = vector.extract_strided_slice %22 {offsets = [0, 0], sizes = [16, 128], strides = [1, 1]} : vector<16x256xf32> to vector<16x128xf32>
    %24 = vector.extract_strided_slice %22 {offsets = [0, 128], sizes = [16, 128], strides = [1, 1]} : vector<16x256xf32> to vector<16x128xf32>
    %25 = arith.mulf %23, %23 : vector<16x128xf32>
    %26 = arith.mulf %24, %24 : vector<16x128xf32>
    %27 = arith.addf %25, %26 : vector<16x128xf32>
    %28 = arith.truncf %27 : vector<16x128xf32> to vector<16x128xbf16>
    %c0_16 = arith.constant 0 : index
    %c0_17 = arith.constant 0 : index
    %29 = vector.load %arg3[%c0_16, %c0_17] : memref<128x32xbf16, #tpu.memory_space<vmem>>, vector<128x32xbf16>
    %cst_18 = arith.constant dense<0.000000e+00> : vector<16x32xf32>
    %30 = tpu.matmul %28, %29, %cst_18 {dimension_numbers = #tpu.dot_dimension_numbers<[1], [0], [0], [1], [0, 0, 1, 1], [], []>} : vector<16x128xbf16>, vector<128x32xbf16>, vector<16x32xf32> -> vector<16x32xf32>
    %cst_19 = arith.constant 1.000000e-10 : f32
    %31 = vector.broadcast %cst_19 : f32 to vector<16x32xf32>
    %32 = arith.maximumf %30, %31 : vector<16x32xf32>
    %33 = math.log %32 : vector<16x32xf32>
    %cst_20 = arith.constant 0.434294492 : f32
    %34 = vector.broadcast %cst_20 : f32 to vector<16x32xf32>
    %35 = arith.mulf %33, %34 : vector<16x32xf32>
    %cst_21 = arith.constant 1.000000e+01 : f32
    %36 = vector.broadcast %cst_21 : f32 to vector<16x32xf32>
    %37 = arith.mulf %36, %35 : vector<16x32xf32>
    %38 = vector.shape_cast %37 : vector<16x32xf32> to vector<1x16x32xf32>
    %cst_22 = arith.constant dense<0xFF800000> : vector<1x16xf32>
    %39 = vector.multi_reduction <maximumf>, %38, %cst_22 [2] : vector<1x16x32xf32> to vector<1x16xf32>
    %40 = vector.shape_cast %39 : vector<1x16xf32> to vector<1x16x1xf32>
    %cst_23 = arith.constant dense<0xFF800000> : vector<1x1xf32>
    %41 = vector.multi_reduction <maximumf>, %40, %cst_23 [1] : vector<1x16x1xf32> to vector<1x1xf32>
    %42 = vector.shape_cast %41 : vector<1x1xf32> to vector<1x1x1xf32>
    %cst_24 = arith.constant dense<0x7F800000> : vector<1x16xf32>
    %43 = vector.multi_reduction <minimumf>, %38, %cst_24 [2] : vector<1x16x32xf32> to vector<1x16xf32>
    %44 = vector.shape_cast %43 : vector<1x16xf32> to vector<1x16x1xf32>
    %cst_25 = arith.constant dense<0x7F800000> : vector<1x1xf32>
    %45 = vector.multi_reduction <minimumf>, %44, %cst_25 [1] : vector<1x16x1xf32> to vector<1x1xf32>
    %46 = vector.shape_cast %45 : vector<1x1xf32> to vector<1x1x1xf32>
    %47 = vector.broadcast %42 : vector<1x1x1xf32> to vector<1x16x32xf32>
    %48 = arith.subf %38, %47 : vector<1x16x32xf32>
    %49 = arith.subf %46, %42 : vector<1x1x1xf32>
    %cst_26 = arith.constant 9.99999997E-7 : f32
    %50 = vector.broadcast %cst_26 : f32 to vector<1x1x1xf32>
    %51 = arith.addf %49, %50 : vector<1x1x1xf32>
    %52 = vector.broadcast %51 : vector<1x1x1xf32> to vector<1x16x32xf32>
    %53 = arith.divf %48, %52 : vector<1x16x32xf32>
    %54 = tpu.transpose %53, [0, 2, 1] : vector<1x16x32xf32> -> vector<1x32x16xf32>
    %c0_27 = arith.constant 0 : index
    %c0_28 = arith.constant 0 : index
    %c0_29 = arith.constant 0 : index
    %55 = vector.load %arg4[%c0_27, %c0_28, %c0_29] : memref<1x32x16xf32, #tpu.memory_space<vmem>>, vector<1x32x16xf32>
    tpu.vector_store %arg4[%c0_27, %c0_28, %c0_29], %54 {strides = array<i32>} : memref<1x32x16xf32, #tpu.memory_space<vmem>>, vector<1x32x16xf32>,
    return
  }
  func.func @transform_0(%arg0: i32) -> (i32, i32, i32) {
    %c0_i32 = arith.constant 0 : i32
    %c0_i32_0 = arith.constant 0 : i32
    %c0_i32_1 = arith.constant 0 : i32
    return %arg0, %c0_i32, %c0_i32_0 : i32, i32, i32
  }
  func.func @transform_1(%arg0: i32) -> (i32, i32) {
    %c0_i32 = arith.constant 0 : i32
    %c0_i32_0 = arith.constant 0 : i32
    %c0_i32_1 = arith.constant 0 : i32
    return %c0_i32, %c0_i32_0 : i32, i32
  }
  func.func @transform_2(%arg0: i32) -> (i32, i32) {
    %c0_i32 = arith.constant 0 : i32
    %c0_i32_0 = arith.constant 0 : i32
    %c0_i32_1 = arith.constant 0 : i32
    return %c0_i32, %c0_i32_0 : i32, i32
  }
  func.func @transform_3(%arg0: i32) -> (i32, i32, i32) {
    %c0_i32 = arith.constant 0 : i32
    %c0_i32_0 = arith.constant 0 : i32
    %c0_i32_1 = arith.constant 0 : i32
    return %arg0, %c0_i32, %c0_i32_0 : i32, i32, i32
  }
}

</mosaic_0001>

<llo_original>
// kernel: tpu_custom_call.1
$region0: #{tpu_custom_call.1}
  #allocation0 [shape = 'u32[]', space=smem, size = 0x4, offset = 0x4, fixed_abs, tag = 'smem constant byte address 0x4 - core index']
  #allocation1 [shape = 'u32[144,128]{1,0:T(1,128)}', space=vmem, size = 0x12000, scoped, tag = 'internal scratch']
  %s0 = inlined_call_operand.vmem [shape: f32[2,19,32], index: 0, kind: input, shape index: {}]
  %s1 = inlined_call_operand.vmem [shape: bf16[128,256], index: 1, kind: input, shape index: {}]
  %s2 = inlined_call_operand.vmem [shape: bf16[128,32], index: 2, kind: input, shape index: {}]
  %s3 = inlined_call_operand.vmem [shape: f32[2,32,16], index: 3, kind: output, shape index: {}]
  %s4 = sld [smem:[#allocation0]]
  $region45: #{tpu_custom_call.1} parent=0
    _
  %s6 = ssub.s32 1, %s4
  %s7 = scalar_select 0, %s6, %s4
  loop: start=0, step=1, limit=4
  $region2: #{tpu_custom_call.1} parent=0 // loop_pre_header
    _
  $region3: #{tpu_custom_call.1} parent=0 // loop_header
    %s9 = sphi 0, %s13
    %p10 = scmp.ge.s32.totalorder %s9, 4
    %s19 = sphi 0, %s21
    %s22 = sphi 0, %s19
    %s23 = sphi 0, %s22
    %s39 = sphi 0, %s23
    %s43 = sphi 0, %s43
    %s45 = sphi 0, %s43
    %s46 = sphi 0, %s45
    %s60 = sphi 0, %s46
    %s64 = sphi 0, %s64
    %s66 = sphi 0, %s64
    %s67 = sphi 0, %s66
    %s81 = sphi 0, %s67
    %s87 = sphi 0, %s89
    %s90 = sphi 0, %s87
    %s91 = sphi 0, %s90
    %s107 = sphi 0, %s91
  $region4: #{tpu_custom_call.1} parent=0 // loop_header_branch
    %12 = sbr.rel (%p10) target = $region8
  $region5: #{tpu_custom_call.1} parent=0 // loop_body
    %s14 = ssub.s32 %s9, 1
    %s15 = ssub.s32 %s9, 2
    %s16 = sadd.s32 %s9, 1
    %s17 = ssub.s32 %s9, %s16
    %p18 = scmp.eq.s32.totalorder %s17, 0
    %s20 = sadd.s32 %s19, 1
    %s21 = scalar_select %p18, %s19, %s20
    %p24 = pneg %p18
    %p25 = scmp.eq.s32.totalorder %s9, 1
    %p26 = por %p24, %p25
    %p27 = scmp.ne.s32.totalorder %s19, %s22
    %p28 = scmp.eq.s32.totalorder %s9, 0
    %p29 = por %p27, %p28
    %p30 = scmp.ne.s32.totalorder %s19, %s22
    %p31 = scmp.eq.s32.totalorder %s14, 1
    %p32 = por %p30, %p31
    %p33 = scmp.ne.s32.totalorder %s22, %s23
    %p34 = scmp.eq.s32.totalorder %s14, 0
    %p35 = por %p33, %p34
    %p36 = scmp.ne.s32.totalorder %s22, %s23
    %p37 = scmp.eq.s32.totalorder %s15, 1
    %p38 = por %p36, %p37
    %p40 = scmp.ne.s32.totalorder %s23, %s39
    %p41 = scmp.eq.s32.totalorder %s15, 0
    %p42 = por %p40, %p41
    %s44 = sadd.s32 %s43, 1
    %p47 = scmp.eq.s32.totalorder %s9, 1
    %p48 = scmp.ne.s32.totalorder %s43, %s45
    %p49 = scmp.eq.s32.totalorder %s9, 0
    %p50 = por %p48, %p49
    %p51 = scmp.ne.s32.totalorder %s43, %s45
    %p52 = scmp.eq.s32.totalorder %s14, 1
    %p53 = por %p51, %p52
    %p54 = scmp.ne.s32.totalorder %s45, %s46
    %p55 = scmp.eq.s32.totalorder %s14, 0
    %p56 = por %p54, %p55
    %p57 = scmp.ne.s32.totalorder %s45, %s46
    %p58 = scmp.eq.s32.totalorder %s15, 1
    %p59 = por %p57, %p58
    %p61 = scmp.ne.s32.totalorder %s46, %s60
    %p62 = scmp.eq.s32.totalorder %s15, 0
    %p63 = por %p61, %p62
    %s65 = sadd.s32 %s64, 1
    %p68 = scmp.eq.s32.totalorder %s9, 1
    %p69 = scmp.ne.s32.totalorder %s64, %s66
    %p70 = scmp.eq.s32.totalorder %s9, 0
    %p71 = por %p69, %p70
    %p72 = scmp.ne.s32.totalorder %s64, %s66
    %p73 = scmp.eq.s32.totalorder %s14, 1
    %p74 = por %p72, %p73
    %p75 = scmp.ne.s32.totalorder %s66, %s67
    %p76 = scmp.eq.s32.totalorder %s14, 0
    %p77 = por %p75, %p76
    %p78 = scmp.ne.s32.totalorder %s66, %s67
    %p79 = scmp.eq.s32.totalorder %s15, 1
    %p80 = por %p78, %p79
    %p82 = scmp.ne.s32.totalorder %s67, %s81
    %p83 = scmp.eq.s32.totalorder %s15, 0
    %p84 = por %p82, %p83
    %s85 = ssub.s32 %s9, %s16
    %p86 = scmp.eq.s32.totalorder %s85, 0
    %s88 = sadd.s32 %s87, 1
    %s89 = scalar_select %p86, %s87, %s88
    %p92 = pneg %p86
    %p93 = scmp.eq.s32.totalorder %s9, 1
    %p94 = por %p92, %p93
    %p95 = scmp.ne.s32.totalorder %s87, %s90
    %p96 = scmp.eq.s32.totalorder %s9, 0
    %p97 = por %p95, %p96
    %p98 = scmp.ne.s32.totalorder %s87, %s90
    %p99 = scmp.eq.s32.totalorder %s14, 1
    %p100 = por %p98, %p99
    %p101 = scmp.ne.s32.totalorder %s90, %s91
    %p102 = scmp.eq.s32.totalorder %s14, 0
    %p103 = por %p101, %p102
    %p104 = scmp.ne.s32.totalorder %s90, %s91
    %p105 = scmp.eq.s32.totalorder %s15, 1
    %p106 = por %p104, %p105
    %p108 = scmp.ne.s32.totalorder %s91, %s107
    %p109 = scmp.eq.s32.totalorder %s15, 0
    %p110 = por %p108, %p109
    %p111 = scmp.le.s32.totalorder 1, %s9
    %p112 = scmp.lt.s32.totalorder %s9, 3
    %p113 = pnand %p111, %p112
    %p114 = pneg %p113
    // Predicated region
    $region9: #{tpu_custom_call.1} parent=5 // pred_check
      _
    $region10: #{tpu_custom_call.1} parent=5 // pred_check_branch
      %116 = sbr.rel (%p113) target = $region12
    $region11: #{tpu_custom_call.1} parent=5 // pred_region
      %s117 = ssub.s32 %s9, 1
      // Predicated region
      $region13: #{tpu_custom_call.1} parent=11 // pred_check
        %p118 = pneg %p56
      $region14: #{tpu_custom_call.1} parent=11 // pred_check_branch
        %120 = sbr.rel (%p118) target = $region16
      $region15: #{tpu_custom_call.1} parent=11 // pred_region
        _
      $region16: #{tpu_custom_call.1} parent=11 // pred_fallthru
        _
      // Predicated region
      $region17: #{tpu_custom_call.1} parent=11 // pred_check
        %p121 = pneg %p77
      $region18: #{tpu_custom_call.1} parent=11 // pred_check_branch
        %123 = sbr.rel (%p121) target = $region20
      $region19: #{tpu_custom_call.1} parent=11 // pred_region
        _
      $region20: #{tpu_custom_call.1} parent=11 // pred_fallthru
        _
    $region12: #{tpu_custom_call.1} parent=5 // pred_fallthru
      _
    %p124 = scmp.lt.s32.totalorder %s9, 2
    // Predicated region
    $region21: #{tpu_custom_call.1} parent=5 // pred_check
      %p125 = pneg %p124
    $region22: #{tpu_custom_call.1} parent=5 // pred_check_branch
      %127 = sbr.rel (%p125) target = $region24
    $region23: #{tpu_custom_call.1} parent=5 // pred_region
      // Predicated region
      $region25: #{tpu_custom_call.1} parent=23 // pred_check
        %p128 = pneg %p29
      $region26: #{tpu_custom_call.1} parent=23 // pred_check_branch
        %130 = sbr.rel (%p128) target = $region28
      $region27: #{tpu_custom_call.1} parent=23 // pred_region
        %p131 = scmp.lt.s32.totalorder %s9, 1
        %s132 = scalar_select %p131, %s9, 1
        %s133 = smul.addr %s132, 3
        %s134 = smul.addr %s133, 8
        %s135 = scalar_lea.vmem %s0, %s134
      $region28: #{tpu_custom_call.1} parent=23 // pred_fallthru
        _
    $region24: #{tpu_custom_call.1} parent=5 // pred_fallthru
      _
    %p136 = scmp.le.s32.totalorder 1, %s9
    %p137 = scmp.lt.s32.totalorder %s9, 3
    %p138 = pnand %p136, %p137
    %p139 = pneg %p138
    // Predicated region
    $region29: #{tpu_custom_call.1} parent=5 // pred_check
      _
    $region30: #{tpu_custom_call.1} parent=5 // pred_check_branch
      %141 = sbr.rel (%p138) target = $region32
    $region31: #{tpu_custom_call.1} parent=5 // pred_region
      %s142 = ssub.s32 %s9, 1
      %p143 = scmp.lt.s32.totalorder %s14, 1
      %s144 = scalar_select %p143, %s14, 1
      %s145 = smul.addr %s144, 3
      %s146 = smul.addr %s145, 8
      %s147 = scalar_lea.vmem %s0, %s146
      %p148 = pneg %p35
      %p149 = pneg %p32
      %p150 = pneg %p56
      %p151 = pneg %p53
      %p152 = pneg %p77
      %p153 = pneg %p74
      %p154 = pneg %p103
      %p155 = pneg %p100
      %p156 = scmp.lt.s32.totalorder %s14, 1
      %s157 = scalar_select %p156, %s14, 1
      %s158 = smul.addr %s157, 4
      %s159 = smul.addr %s158, 8
      %s160 = scalar_lea.vmem %s3, %s159
      %p161 = scmp.lt.s32.totalorder %s14, 1
      %s162 = scalar_select %p161, %s14, 1
      %s163 = smul.addr %s162, 3
      %s164 = smul.addr %s163, 8
      %s165 = scalar_lea.vmem %s0, %s164
      %p166 = scmp.lt.s32.totalorder %s14, 1
      %s167 = scalar_select %p166, %s14, 1
      %s168 = smul.addr %s167, 4
      %s169 = smul.addr %s168, 8
      %s170 = scalar_lea.vmem %s3, %s169
      %v172 = vld [vmem:[%s165] sm:$0xff]
      %v173 = vld [vmem:[%s165 + $0x8] sm:$0xff]
      %v174 = vpack.c.bf16 %v173, %v172
      %v175 = vld [vmem:[%s1] sm:$0xff]
      %v176 = vld [vmem:[%s1 + $0x8] sm:$0xff]
      %v177 = vld [vmem:[%s1 + $0x10] sm:$0xff]
      %v178 = vld [vmem:[%s1 + $0x18] sm:$0xff]
      %v179 = vld [vmem:[%s165 + $0x1] sm:$0xff]
      %v180 = vld [vmem:[%s165 + $0x9] sm:$0xff]
      %v181 = vpack.c.bf16 %v180, %v179
      %v182 = vld [vmem:[%s1 + $0x20] sm:$0xff]
      %v183 = vld [vmem:[%s1 + $0x28] sm:$0xff]
      %v184 = vld [vmem:[%s1 + $0x30] sm:$0xff]
      %v185 = vld [vmem:[%s1 + $0x38] sm:$0xff]
      %v190 = vunpack.c.l.b16 %v182
      %v191 = vunpack.c.h.b16 %v182
      %v192 = vunpack.c.l.b16 %v183
      %v193 = vunpack.c.h.b16 %v183
      %v194 = vunpack.c.l.b16 %v184
      %v195 = vunpack.c.h.b16 %v184
      %v196 = vunpack.c.l.b16 %v185
      %v197 = vunpack.c.h.b16 %v185
      %v198 = vpack.c.b16 %v192, %v190
      %v199 = vpack.c.b16 %v193, %v191
      %v200 = vpack.c.b16 %v196, %v194
      %v201 = vpack.c.b16 %v197, %v195
      %vm206 = vcmask 261120
      %v208 = vsel %vm206, %v181, 0
      %210 = vmatprep.subr.bf16.mxu0 %v199
      %211 = vmatpush1.bf16.msra.mxu0 %v198
      %212 = vmatprep.subr.bf16.mxu0 %v201
      %213 = vmatpush1.bf16.msra.mxu0 %v200
      %214 = vmatprep.subr.bf16.mxu0 0
      %215 = vmatpush1.bf16.msra.mxu0 0
      %216 = vmatprep.subr.bf16.mxu0 0
      %217 = vmatpush1.bf16.msra.mxu0 0
      %218 = vmatprep.subr.bf16.mxu0 0
      %219 = vmatpush1.bf16.msra.mxu0 0
      %220 = vmatprep.subr.bf16.mxu0 0
      %221 = vmatpush1.bf16.msra.mxu0 0
      %222 = vmatprep.subr.bf16.mxu0 0
      %223 = vmatpush1.bf16.msra.mxu0 0
      %224 = vmatprep.subr.bf16.mxu0 0
      %225 = vmatpush1.bf16.msra.mxu0 0
      %226 = vmatprep.subr.bf16.mxu0 0
      %227 = vmatpush1.bf16.msra.mxu0 0
      %228 = vmatprep.subr.bf16.mxu0 0
      %229 = vmatpush1.bf16.msra.mxu0 0
      %230 = vmatprep.subr.bf16.mxu0 0
      %231 = vmatpush1.bf16.msra.mxu0 0
      %232 = vmatprep.subr.bf16.mxu0 0
      %233 = vmatpush1.bf16.msra.mxu0 0
      %234 = vmatprep.subr.bf16.mxu0 0
      %235 = vmatpush1.bf16.msra.mxu0 0
      %236 = vmatprep.subr.bf16.mxu0 0
      %237 = vmatpush1.bf16.msra.mxu0 0
      %238 = vmatprep.subr.bf16.mxu0 0
      %239 = vmatpush1.bf16.msra.mxu0 0
      %240 = vmatprep.subr.bf16.mxu0 0
      %241 = vmatpush1.bf16.msra.mxu0 0
      %242 = vmatprep.mubr.bf16.mxu0 0
      %243 = vmatmul.mubr.bf16.gmra.mrb[0].mxu0 %v208
      %v244 = vpop.f32.mrb[0].mxu0
      %v245 = vadd.f32 0.0, %v244
      %v246 = vpop.f32.mrb[0].mxu0
      %v247 = vadd.f32 0.0, %v246
      %v248 = vpop.f32.mrb[0].mxu0
      %v249 = vadd.f32 0.0, %v248
      %v250 = vpop.f32.mrb[0].mxu0
      %v251 = vadd.f32 0.0, %v250
      %252 = vdwg.mxu0
      %v257 = vunpack.c.l.b16 %v175
      %v258 = vunpack.c.h.b16 %v175
      %v259 = vunpack.c.l.b16 %v176
      %v260 = vunpack.c.h.b16 %v176
      %v261 = vunpack.c.l.b16 %v177
      %v262 = vunpack.c.h.b16 %v177
      %v263 = vunpack.c.l.b16 %v178
      %v264 = vunpack.c.h.b16 %v178
      %v265 = vpack.c.b16 %v259, %v257
      %v266 = vpack.c.b16 %v260, %v258
      %v267 = vpack.c.b16 %v263, %v261
      %v268 = vpack.c.b16 %v264, %v262
      %v274 = vsel %vm206, %v174, 0
      %276 = vmatprep.subr.bf16.mxu0 %v266
      %277 = vmatpush1.bf16.msra.mxu0 %v265
      %278 = vmatprep.subr.bf16.mxu0 %v268
      %279 = vmatpush1.bf16.msra.mxu0 %v267
      %280 = vmatprep.subr.bf16.mxu0 0
      %281 = vmatpush1.bf16.msra.mxu0 0
      %282 = vmatprep.subr.bf16.mxu0 0
      %283 = vmatpush1.bf16.msra.mxu0 0
      %284 = vmatprep.subr.bf16.mxu0 0
      %285 = vmatpush1.bf16.msra.mxu0 0
      %286 = vmatprep.subr.bf16.mxu0 0
      %287 = vmatpush1.bf16.msra.mxu0 0
      %288 = vmatprep.subr.bf16.mxu0 0
      %289 = vmatpush1.bf16.msra.mxu0 0
      %290 = vmatprep.subr.bf16.mxu0 0
      %291 = vmatpush1.bf16.msra.mxu0 0
      %292 = vmatprep.subr.bf16.mxu0 0
      %293 = vmatpush1.bf16.msra.mxu0 0
      %294 = vmatprep.subr.bf16.mxu0 0
      %295 = vmatpush1.bf16.msra.mxu0 0
      %296 = vmatprep.subr.bf16.mxu0 0
      %297 = vmatpush1.bf16.msra.mxu0 0
      %298 = vmatprep.subr.bf16.mxu0 0
      %299 = vmatpush1.bf16.msra.mxu0 0
      %300 = vmatprep.subr.bf16.mxu0 0
      %301 = vmatpush1.bf16.msra.mxu0 0
      %302 = vmatprep.subr.bf16.mxu0 0
      %303 = vmatpush1.bf16.msra.mxu0 0
      %304 = vmatprep.subr.bf16.mxu0 0
      %305 = vmatpush1.bf16.msra.mxu0 0
      %306 = vmatprep.subr.bf16.mxu0 0
      %307 = vmatpush1.bf16.msra.mxu0 0
      %308 = vmatprep.mubr.bf16.mxu0 0
      %309 = vmatmul.mubr.bf16.gmra.mrb[0].mxu0 %v274
      %v310 = vpop.f32.mrb[0].mxu0
      %v311 = vadd.f32 %v245, %v310
      %v312 = vpop.f32.mrb[0].mxu0
      %v313 = vadd.f32 %v247, %v312
      %v314 = vpop.f32.mrb[0].mxu0
      %v315 = vadd.f32 %v249, %v314
      %v316 = vpop.f32.mrb[0].mxu0
      %v317 = vadd.f32 %v251, %v316
      %318 = vdwg.mxu0
      %v319 = vld [vmem:[%s165 + $0x2] sm:$0xff]
      %v320 = vld [vmem:[%s165 + $0xa] sm:$0xff]
      %v321 = vpack.c.bf16 %v320, %v319
      %v322 = vld [vmem:[%s1 + $0x40] sm:$0xff]
      %v323 = vld [vmem:[%s1 + $0x48] sm:$0xff]
      %v324 = vld [vmem:[%s1 + $0x50] sm:$0xff]
      %v325 = vld [vmem:[%s1 + $0x58] sm:$0xff]
      %v330 = vunpack.c.l.b16 %v322
      %v331 = vunpack.c.h.b16 %v322
      %v332 = vunpack.c.l.b16 %v323
      %v333 = vunpack.c.h.b16 %v323
      %v334 = vunpack.c.l.b16 %v324
      %v335 = vunpack.c.h.b16 %v324
      %v336 = vunpack.c.l.b16 %v325
      %v337 = vunpack.c.h.b16 %v325
      %v338 = vpack.c.b16 %v332, %v330
      %v339 = vpack.c.b16 %v333, %v331
      %v340 = vpack.c.b16 %v336, %v334
      %v341 = vpack.c.b16 %v337, %v335
      %v347 = vsel %vm206, %v321, 0
      %349 = vmatprep.subr.bf16.mxu0 %v339
      %350 = vmatpush1.bf16.msra.mxu0 %v338
      %351 = vmatprep.subr.bf16.mxu0 %v341
      %352 = vmatpush1.bf16.msra.mxu0 %v340
      %353 = vmatprep.subr.bf16.mxu0 0
      %354 = vmatpush1.bf16.msra.mxu0 0
      %355 = vmatprep.subr.bf16.mxu0 0
      %356 = vmatpush1.bf16.msra.mxu0 0
      %357 = vmatprep.subr.bf16.mxu0 0
      %358 = vmatpush1.bf16.msra.mxu0 0
      %359 = vmatprep.subr.bf16.mxu0 0
      %360 = vmatpush1.bf16.msra.mxu0 0
      %361 = vmatprep.subr.bf16.mxu0 0
      %362 = vmatpush1.bf16.msra.mxu0 0
      %363 = vmatprep.subr.bf16.mxu0 0
      %364 = vmatpush1.bf16.msra.mxu0 0
      %365 = vmatprep.subr.bf16.mxu0 0
      %366 = vmatpush1.bf16.msra.mxu0 0
      %367 = vmatprep.subr.bf16.mxu0 0
      %368 = vmatpush1.bf16.msra.mxu0 0
      %369 = vmatprep.subr.bf16.mxu0 0
      %370 = vmatpush1.bf16.msra.mxu0 0
      %371 = vmatprep.subr.bf16.mxu0 0
      %372 = vmatpush1.bf16.msra.mxu0 0
      %373 = vmatprep.subr.bf16.mxu0 0
      %374 = vmatpush1.bf16.msra.mxu0 0
      %375 = vmatprep.subr.bf16.mxu0 0
      %376 = vmatpush1.bf16.msra.mxu0 0
      %377 = vmatprep.subr.bf16.mxu0 0
      %378 = vmatpush1.bf16.msra.mxu0 0
      %379 = vmatprep.subr.bf16.mxu0 0
      %380 = vmatpush1.bf16.msra.mxu0 0
      %381 = vmatprep.mubr.bf16.mxu0 0
      %382 = vmatmul.mubr.bf16.gmra.mrb[0].mxu0 %v347
      %v383 = vpop.f32.mrb[0].mxu0
      %v384 = vadd.f32 0.0, %v383
      %v385 = vpop.f32.mrb[0].mxu0
      %v386 = vadd.f32 0.0, %v385
      %v387 = vpop.f32.mrb[0].mxu0
      %v388 = vadd.f32 0.0, %v387
      %v389 = vpop.f32.mrb[0].mxu0
      %v390 = vadd.f32 0.0, %v389
      %391 = vdwg.mxu0
      %v392 = vadd.f32 %v311, %v384
      %v393 = vadd.f32 %v313, %v386
      %v394 = vadd.f32 %v315, %v388
      %v395 = vadd.f32 %v317, %v390
      %v396 = vld [vmem:[%s165 + $0x3] sm:$0xff]
      %v397 = vld [vmem:[%s165 + $0xb] sm:$0xff]
      %v398 = vpack.c.bf16 %v397, %v396
      %v399 = vld [vmem:[%s1 + $0x60] sm:$0xff]
      %v400 = vld [vmem:[%s1 + $0x68] sm:$0xff]
      %v401 = vld [vmem:[%s1 + $0x70] sm:$0xff]
      %v402 = vld [vmem:[%s1 + $0x78] sm:$0xff]
      %v407 = vunpack.c.l.b16 %v399
      %v408 = vunpack.c.h.b16 %v399
      %v409 = vunpack.c.l.b16 %v400
      %v410 = vunpack.c.h.b16 %v400
      %v411 = vunpack.c.l.b16 %v401
      %v412 = vunpack.c.h.b16 %v401
      %v413 = vunpack.c.l.b16 %v402
      %v414 = vunpack.c.h.b16 %v402
      %v415 = vpack.c.b16 %v409, %v407
      %v416 = vpack.c.b16 %v410, %v408
      %v417 = vpack.c.b16 %v413, %v411
      %v418 = vpack.c.b16 %v414, %v412
      %v424 = vsel %vm206, %v398, 0
      %426 = vmatprep.subr.bf16.mxu0 %v416
      %427 = vmatpush1.bf16.msra.mxu0 %v415
      %428 = vmatprep.subr.bf16.mxu0 %v418
      %429 = vmatpush1.bf16.msra.mxu0 %v417
      %430 = vmatprep.subr.bf16.mxu0 0
      %431 = vmatpush1.bf16.msra.mxu0 0
      %432 = vmatprep.subr.bf16.mxu0 0
      %433 = vmatpush1.bf16.msra.mxu0 0
      %434 = vmatprep.subr.bf16.mxu0 0
      %435 = vmatpush1.bf16.msra.mxu0 0
      %436 = vmatprep.subr.bf16.mxu0 0
      %437 = vmatpush1.bf16.msra.mxu0 0
      %438 = vmatprep.subr.bf16.mxu0 0
      %439 = vmatpush1.bf16.msra.mxu0 0
      %440 = vmatprep.subr.bf16.mxu0 0
      %441 = vmatpush1.bf16.msra.mxu0 0
      %442 = vmatprep.subr.bf16.mxu0 0
      %443 = vmatpush1.bf16.msra.mxu0 0
      %444 = vmatprep.subr.bf16.mxu0 0
      %445 = vmatpush1.bf16.msra.mxu0 0
      %446 = vmatprep.subr.bf16.mxu0 0
      %447 = vmatpush1.bf16.msra.mxu0 0
      %448 = vmatprep.subr.bf16.mxu0 0
      %449 = vmatpush1.bf16.msra.mxu0 0
      %450 = vmatprep.subr.bf16.mxu0 0
      %451 = vmatpush1.bf16.msra.mxu0 0
      %452 = vmatprep.subr.bf16.mxu0 0
      %453 = vmatpush1.bf16.msra.mxu0 0
      %454 = vmatprep.subr.bf16.mxu0 0
      %455 = vmatpush1.bf16.msra.mxu0 0
      %456 = vmatprep.subr.bf16.mxu0 0
      %457 = vmatpush1.bf16.msra.mxu0 0
      %458 = vmatprep.mubr.bf16.mxu0 0
      %459 = vmatmul.mubr.bf16.gmra.mrb[0].mxu0 %v424
      %v460 = vpop.f32.mrb[0].mxu0
      %v461 = vadd.f32 0.0, %v460
      %v462 = vpop.f32.mrb[0].mxu0
      %v463 = vadd.f32 0.0, %v462
      %v464 = vpop.f32.mrb[0].mxu0
      %v465 = vadd.f32 0.0, %v464
      %v466 = vpop.f32.mrb[0].mxu0
      %v467 = vadd.f32 0.0, %v466
      %468 = vdwg.mxu0
      %v469 = vadd.f32 %v392, %v461
      %v470 = vadd.f32 %v393, %v463
      %v471 = vadd.f32 %v394, %v465
      %v472 = vadd.f32 %v395, %v467
      %v473 = vmul.f32 %v469, %v469
      %v474 = vmul.f32 %v471, %v471
      %v475 = vmul.f32 %v470, %v470
      %v476 = vmul.f32 %v472, %v472
      %v477 = vadd.f32 %v473, %v475
      %v478 = vadd.f32 %v474, %v476
      %v479 = vpack.c.bf16 %v478, %v477
      %v480 = vld [vmem:[%s2] sm:$0xf]
      %v481 = vld [vmem:[%s2 + $0x4] sm:$0xf]
      %v482 = vld [vmem:[%s2 + $0x8] sm:$0xf]
      %v483 = vld [vmem:[%s2 + $0xc] sm:$0xf]
      %v484 = vld [vmem:[%s2 + $0x10] sm:$0xf]
      %v485 = vld [vmem:[%s2 + $0x14] sm:$0xf]
      %v486 = vld [vmem:[%s2 + $0x18] sm:$0xf]
      %v487 = vld [vmem:[%s2 + $0x1c] sm:$0xf]
      %v488 = vld [vmem:[%s2 + $0x20] sm:$0xf]
      %v489 = vld [vmem:[%s2 + $0x24] sm:$0xf]
      %v490 = vld [vmem:[%s2 + $0x28] sm:$0xf]
      %v491 = vld [vmem:[%s2 + $0x2c] sm:$0xf]
      %v492 = vld [vmem:[%s2 + $0x30] sm:$0xf]
      %v493 = vld [vmem:[%s2 + $0x34] sm:$0xf]
      %v494 = vld [vmem:[%s2 + $0x38] sm:$0xf]
      %v495 = vld [vmem:[%s2 + $0x3c] sm:$0xf]
      %v512 = vunpack.c.l.b16 %v480
      %v513 = vunpack.c.l.b16 %v481
      %v514 = vunpack.c.l.b16 %v482
      %v515 = vunpack.c.l.b16 %v483
      %v516 = vunpack.c.l.b16 %v484
      %v517 = vunpack.c.l.b16 %v485
      %v518 = vunpack.c.l.b16 %v486
      %v519 = vunpack.c.l.b16 %v487
      %v520 = vunpack.c.l.b16 %v488
      %v521 = vunpack.c.l.b16 %v489
      %v522 = vunpack.c.l.b16 %v490
      %v523 = vunpack.c.l.b16 %v491
      %v524 = vunpack.c.l.b16 %v492
      %v525 = vunpack.c.l.b16 %v493
      %v526 = vunpack.c.l.b16 %v494
      %v527 = vunpack.c.l.b16 %v495
      %v528 = vpack.c.b16 %v513, %v512
      %v529 = vpack.c.b16 %v515, %v514
      %v530 = vpack.c.b16 %v517, %v516
      %v531 = vpack.c.b16 %v519, %v518
      %v532 = vpack.c.b16 %v521, %v520
      %v533 = vpack.c.b16 %v523, %v522
      %v534 = vpack.c.b16 %v525, %v524
      %v535 = vpack.c.b16 %v527, %v526
      %544 = vmatprep.subr.bf16.mxu0 0
      %545 = vmatpush1.bf16.msra.mxu0 %v528
      %546 = vmatprep.subr.bf16.mxu0 0
      %547 = vmatpush1.bf16.msra.mxu0 %v529
      %548 = vmatprep.subr.bf16.mxu0 0
      %549 = vmatpush1.bf16.msra.mxu0 %v530
      %550 = vmatprep.subr.bf16.mxu0 0
      %551 = vmatpush1.bf16.msra.mxu0 %v531
      %552 = vmatprep.subr.bf16.mxu0 0
      %553 = vmatpush1.bf16.msra.mxu0 %v532
      %554 = vmatprep.subr.bf16.mxu0 0
      %555 = vmatpush1.bf16.msra.mxu0 %v533
      %556 = vmatprep.subr.bf16.mxu0 0
      %557 = vmatpush1.bf16.msra.mxu0 %v534
      %558 = vmatprep.subr.bf16.mxu0 0
      %559 = vmatpush1.bf16.msra.mxu0 %v535
      %560 = vmatprep.subr.bf16.mxu0 0
      %561 = vmatpush1.bf16.msra.mxu0 0
      %562 = vmatprep.subr.bf16.mxu0 0
      %563 = vmatpush1.bf16.msra.mxu0 0
      %564 = vmatprep.subr.bf16.mxu0 0
      %565 = vmatpush1.bf16.msra.mxu0 0
      %566 = vmatprep.subr.bf16.mxu0 0
      %567 = vmatpush1.bf16.msra.mxu0 0
      %568 = vmatprep.subr.bf16.mxu0 0
      %569 = vmatpush1.bf16.msra.mxu0 0
      %570 = vmatprep.subr.bf16.mxu0 0
      %571 = vmatpush1.bf16.msra.mxu0 0
      %572 = vmatprep.subr.bf16.mxu0 0
      %573 = vmatpush1.bf16.msra.mxu0 0
      %574 = vmatprep.subr.bf16.mxu0 0
      %575 = vmatpush1.bf16.msra.mxu0 0
      %576 = vmatprep.mubr.bf16.mxu0 0
      %577 = vmatmul.mubr.bf16.gmra.mrb[0].mxu0 %v479
      %v578 = vpop.f32.mrb[0].mxu0
      %v579 = vadd.f32 0.0, %v578
      %v580 = vpop.f32.mrb[0].mxu0
      %v581 = vpop.f32.mrb[0].mxu0
      %v582 = vadd.f32 0.0, %v581
      %v583 = vpop.f32.mrb[0].mxu0
      %584 = vdwg.mxu0
      %v585 = vmax.f32 %v579, 1e-10
      %v586 = vmax.f32 %v582, 1e-10
      %v587 = vlog2.pop %v585
      %v588 = vmul.f32 %v587, 0.6931472
      %v589 = vlog2.pop %v586
      %v590 = vmul.f32 %v589, 0.6931472
      %v591 = vmul.f32 %v588, 0.4342945
      %v592 = vmul.f32 %v590, 0.4342945
      %v593 = vmul.f32 %v591, 10.0
      %v594 = vmul.f32 %v592, 10.0
      %v595 = vsel %vm206, %v593, -inf
      %596 = vmax.xlane.f32.xlu0 %v595
      %v597 = vpop.xlane.xlu0 %596
      %v598 = vsel %vm206, %v594, -inf
      %599 = vmax.xlane.f32.xlu0 %v598
      %v600 = vpop.xlane.xlu0 %599
      %v601 = vmax.f32 %v597, %v600
      %v602 = vrot.slane %v601, 4
      %v603 = vmax.f32 %v601, %v602
      %v604 = vrot.slane %v603, 2
      %v605 = vmax.f32 %v603, %v604
      %v606 = vrot.slane %v605, 1
      %v607 = vmax.f32 %v605, %v606
      %v608 = vsel %vm206, %v593, inf
      %609 = vmin.xlane.f32.xlu0 %v608
      %v610 = vpop.xlane.xlu0 %609
      %v611 = vsel %vm206, %v594, inf
      %612 = vmin.xlane.f32.xlu0 %v611
      %v613 = vpop.xlane.xlu0 %612
      %v614 = vmin.f32 %v610, %v613
      %v615 = vrot.slane %v614, 4
      %v616 = vmin.f32 %v614, %v615
      %v617 = vrot.slane %v616, 2
      %v618 = vmin.f32 %v616, %v617
      %v619 = vrot.slane %v618, 1
      %v620 = vmin.f32 %v618, %v619
      %v621 = vsub.f32 %v593, %v607
      %v622 = vsub.f32 %v594, %v607
      %v623 = vsub.f32 %v620, %v607
      %v624 = vadd.f32 %v623, 1e-06
      %v625 = vrcp.pop %v624
      %v626 = vmul.f32 %v621, %v625
      %v627 = vmul.f32 %v622, %v625
      %628 = vxpose.xlu0.b32.start [1/16] %v626, 128
      %629 = vxpose.xlu0.b32.cont [2/16] %v627, 128
      %630 = vxpose.xlu0.b32.cont [3/16] 0.0, 128
      %631 = vxpose.xlu0.b32.cont [4/16] 0.0, 128
      %632 = vxpose.xlu0.b32.cont [5/16] 0.0, 128
      %633 = vxpose.xlu0.b32.cont [6/16] 0.0, 128
      %634 = vxpose.xlu0.b32.cont [7/16] 0.0, 128
      %635 = vxpose.xlu0.b32.cont [8/16] 0.0, 128
      %636 = vxpose.xlu0.b32.cont [9/16] 0.0, 128
      %637 = vxpose.xlu0.b32.cont [10/16] 0.0, 128
      %638 = vxpose.xlu0.b32.cont [11/16] 0.0, 128
      %639 = vxpose.xlu0.b32.cont [12/16] 0.0, 128
      %640 = vxpose.xlu0.b32.cont [13/16] 0.0, 128
      %641 = vxpose.xlu0.b32.cont [14/16] 0.0, 128
      %642 = vxpose.xlu0.b32.cont [15/16] 0.0, 128
      %643 = vxpose.xlu0.b32.end [16/16] 0.0, 128
      %v644 = vpop.trf.xlu0
      %v645 = vpop.trf.xlu0
      %v646 = vpop.trf.xlu0
      %v647 = vpop.trf.xlu0
      %v648 = vpop.trf.xlu0
      %v649 = vpop.trf.xlu0
      %v650 = vpop.trf.xlu0
      %v651 = vpop.trf.xlu0
      %v652 = vpop.trf.xlu0
      %v653 = vpop.trf.xlu0
      %v654 = vpop.trf.xlu0
      %v655 = vpop.trf.xlu0
      %v656 = vpop.trf.xlu0
      %v657 = vpop.trf.xlu0
      %v658 = vpop.trf.xlu0
      %v659 = vpop.trf.xlu0
      %vm660 = vcmask 130048
      %661 = vst.msk [vmem:[%s170] sm:$0xff] %vm660, %v644
      %662 = vst.msk [vmem:[%s170 + $0x8] sm:$0xff] %vm660, %v645
      %663 = vst.msk [vmem:[%s170 + $0x10] sm:$0xff] %vm660, %v646
      %664 = vst.msk [vmem:[%s170 + $0x18] sm:$0xff] %vm660, %v647
      %p665 = scmp.lt.s32.totalorder %s14, 1
      %s666 = scalar_select %p665, %s14, 1
      %s667 = smul.addr %s666, 4
      %s668 = smul.addr %s667, 8
      %s669 = scalar_lea.vmem %s3, %s668
      // Predicated region
      $region33: #{tpu_custom_call.1} parent=31 // pred_check
        %p670 = pneg %p100
      $region34: #{tpu_custom_call.1} parent=31 // pred_check_branch
        %672 = sbr.rel (%p670) target = $region36
      $region35: #{tpu_custom_call.1} parent=31 // pred_region
        _
      $region36: #{tpu_custom_call.1} parent=31 // pred_fallthru
        _
    $region32: #{tpu_custom_call.1} parent=5 // pred_fallthru
      _
    %p673 = scmp.le.s32.totalorder 2, %s9
    // Predicated region
    $region37: #{tpu_custom_call.1} parent=5 // pred_check
      %p674 = pneg %p673
    $region38: #{tpu_custom_call.1} parent=5 // pred_check_branch
      %676 = sbr.rel (%p674) target = $region40
    $region39: #{tpu_custom_call.1} parent=5 // pred_region
      %s677 = ssub.s32 %s9, 2
      // Predicated region
      $region41: #{tpu_custom_call.1} parent=39 // pred_check
        %p678 = pneg %p106
      $region42: #{tpu_custom_call.1} parent=39 // pred_check_branch
        %680 = sbr.rel (%p678) target = $region44
      $region43: #{tpu_custom_call.1} parent=39 // pred_region
        %p681 = scmp.lt.s32.totalorder %s15, 1
        %s682 = scalar_select %p681, %s15, 1
        %s683 = smul.addr %s682, 4
        %s684 = smul.addr %s683, 8
        %s685 = scalar_lea.vmem %s3, %s684
      $region44: #{tpu_custom_call.1} parent=39 // pred_fallthru
        _
    $region40: #{tpu_custom_call.1} parent=5 // pred_fallthru
      _
  $region6: #{tpu_custom_call.1} parent=0 // loop_footer
    %s13 = sadd.s32 1, %s9
  $region7: #{tpu_custom_call.1} parent=0 // loop_footer_branch
    %8 = sbr.rel target = $region3
  $region8: #{tpu_custom_call.1} parent=0 // loop_exit
    _

</llo_original>
